<compile_context>
chip_gen: v7x
topology: tpu7x:2x2x1
jax: 0.10.0
libtpu: 0.0.40
codegen_flags: <defaults>
</compile_context>

<pallas_src>
import functools
import itertools
import random

import numpy as np
import jax
import jax.numpy as jnp
from jax.experimental import pallas as pl
from jax.experimental.pallas import tpu as pltpu

_LANES = 128


# ----------------------------- Pallas kernel -----------------------------

def _margin_loss_kernel(x_ref, out_ref, *, d, margin):
    # x_ref: (T, lanes) f32 in VMEM, lane-dense: [anchor | positive | negative | beta | pad]
    a = x_ref[:, 0:d]                      # (T, D)
    p = x_ref[:, d:2 * d]                  # (T, D)
    n = x_ref[:, 2 * d:3 * d]              # (T, D)
    beta = x_ref[:, 3 * d:3 * d + 1]       # (T, 1)

    # d_ap = sqrt(sum((a - p)^2) + 1e-8), d_an = sqrt(sum((a - n)^2) + 1e-8)
    d_ap = jnp.sqrt(jnp.sum((a - p) ** 2, axis=-1, keepdims=True) + 1e-8)   # (T, 1)
    d_an = jnp.sqrt(jnp.sum((a - n) ** 2, axis=-1, keepdims=True) + 1e-8)   # (T, 1)

    pos_loss = jnp.maximum(d_ap - beta + margin, 0.0)
    neg_loss = jnp.maximum(beta - d_an + margin, 0.0)

    # PyTorch: sum((pos_loss > 0) + (neg_loss > 0)) -- bool + bool == logical OR.
    pair_count = jnp.sum(
        jnp.logical_or(pos_loss > 0.0, neg_loss > 0.0).astype(jnp.float32))
    total = jnp.sum(pos_loss + neg_loss)

    # pair_count == 0  =>  every hinge term is 0  =>  total == 0, so dividing by
    # max(pair_count, 1) reproduces "total if pair_count == 0 else total / pair_count" exactly.
    out_ref[0, 0] = total / jnp.maximum(pair_count, 1.0)


@functools.partial(jax.jit, static_argnames=("margin",))
def margin_loss_pallas(batch, a_idx, p_idx, n_idx, cls_idx, beta, margin=0.2):
    """batch: (BS, D) embeddings; a/p/n_idx: (T,) int32 batch indices; cls_idx: (T,) int32
    anchor class ids; beta: (n_classes,) trainable class margins. Returns scalar loss."""
    batch = batch.astype(jnp.float32)
    T = a_idx.shape[0]
    D = batch.shape[1]
    lanes = max(_LANES, ((3 * D + 1 + _LANES - 1) // _LANES) * _LANES)

    # Triplet gather + per-anchor class beta (tiny shapes; fused under this jit).
    anchors = batch[a_idx]                                     # (T, D)
    positives = batch[p_idx]                                   # (T, D)
    negatives = batch[n_idx]                                   # (T, D)
    beta_t = beta.astype(jnp.float32)[cls_idx].reshape(T, 1)   # (T, 1)

    # One lane-dense slab => one input DMA, full 128-lane vregs, static lane slices in-kernel.
    pad = lanes - (3 * D + 1)
    slab = jnp.concatenate(
        [anchors, positives, negatives, beta_t, jnp.zeros((T, pad), jnp.float32)],
        axis=1)                                                # (T, lanes)

    kernel = functools.partial(_margin_loss_kernel, d=D, margin=float(margin))
    out = pl.pallas_call(
        kernel,
        out_shape=jax.ShapeDtypeStruct((1, 1), jnp.float32),
        in_specs=[pl.BlockSpec(memory_space=pltpu.MemorySpace.VMEM)],
        out_specs=pl.BlockSpec(memory_space=pltpu.MemorySpace.SMEM),
    )(slab)
    return out[0, 0]


# ------------------- host-side triplet sampling (Sampler, method='random') -------------------

def random_triplet_sampling(labels, bs, seed=0):
    rng = random.Random(seed)
    unique_classes = np.unique(labels)
    indices = np.arange(bs)
    class_dict = {c: indices[labels == c] for c in unique_classes}
    class_triplets = [
        list(itertools.product([x], [x], [y for y in unique_classes if x != y]))
        for x in unique_classes
    ]
    class_triplets = [t for sub in class_triplets for t in sub]
    trips = [
        [t for t in itertools.product(*[class_dict[j] for j in ct]) if t[0] != t[1]]
        for ct in class_triplets
    ]
    trips = [t for sub in trips for t in sub]
    return rng.sample(trips, bs)


# ----------------------------------------- main -----------------------------------------

if __name__ == "__main__":
    BS, D, N_CLASSES = 8, 32, 100
    MARGIN = 0.2
    BETA_INIT = 1.2

    key = jax.random.PRNGKey(0)
    batch = jax.random.normal(key, (BS, D), dtype=jnp.float32)         # (BS, embed_dim)
    labels = np.array([0, 0, 0, 0, 1, 1, 1, 1], dtype=np.int32)        # (BS,)

    # Trainable class margins beta (nn.Parameter(torch.ones(n_classes) * beta)), deterministic.
    beta = jnp.ones((N_CLASSES,), dtype=jnp.float32) * BETA_INIT

    # Sample BS triplets of batch indices (anchor, positive, negative) -- host side.
    triplets = random_triplet_sampling(labels, BS, seed=0)
    a_idx = np.array([t[0] for t in triplets], dtype=np.int32)
    p_idx = np.array([t[1] for t in triplets], dtype=np.int32)
    n_idx = np.array([t[2] for t in triplets], dtype=np.int32)
    cls_idx = labels[a_idx].astype(np.int32)                           # anchor class per triplet

    loss = margin_loss_pallas(
        batch,
        jnp.asarray(a_idx), jnp.asarray(p_idx), jnp.asarray(n_idx),
        jnp.asarray(cls_idx), beta, margin=MARGIN)
    loss = jax.block_until_ready(loss)

    # numpy reference check
    bn = np.asarray(batch)
    d_ap = np.sqrt(((bn[a_idx] - bn[p_idx]) ** 2).sum(-1) + 1e-8)
    d_an = np.sqrt(((bn[a_idx] - bn[n_idx]) ** 2).sum(-1) + 1e-8)
    bt = np.asarray(beta)[labels[a_idx]]
    pos = np.maximum(d_ap - bt + MARGIN, 0.0)
    neg = np.maximum(bt - d_an + MARGIN, 0.0)
    pc = float(np.sum(np.logical_or(pos > 0.0, neg > 0.0)))
    ref = (pos + neg).sum() if pc == 0.0 else (pos + neg).sum() / pc

    assert abs(float(loss) - float(ref)) < 1e-4, (float(loss), float(ref))
    print("KERNEL_OK")
</pallas_src>

<mosaic_0001>
module attributes {stable_mosaic.version = 11 : i64} {
  func.func @_margin_loss_kernel(%arg0: memref<8x128xf32, #tpu.memory_space<vmem>>, %arg1: memref<1x1xf32, #tpu.memory_space<smem>>) attributes {dimension_semantics = [], scalar_prefetch = 0 : i64, scratch_operands = 0 : i64, tpu.core_type = #tpu.core_type<tc>} {
    %c0 = arith.constant 0 : index
    %c0_0 = arith.constant 0 : index
    %0 = vector.load %arg0[%c0, %c0_0] : memref<8x128xf32, #tpu.memory_space<vmem>>, vector<8x32xf32>
    %c0_1 = arith.constant 0 : index
    %c32 = arith.constant 32 : index
    %1 = vector.load %arg0[%c0_1, %c32] : memref<8x128xf32, #tpu.memory_space<vmem>>, vector<8x32xf32>
    %c0_2 = arith.constant 0 : index
    %c64 = arith.constant 64 : index
    %2 = vector.load %arg0[%c0_2, %c64] : memref<8x128xf32, #tpu.memory_space<vmem>>, vector<8x32xf32>
    %c0_3 = arith.constant 0 : index
    %c96 = arith.constant 96 : index
    %3 = vector.load %arg0[%c0_3, %c96] : memref<8x128xf32, #tpu.memory_space<vmem>>, vector<8x1xf32>
    %4 = arith.subf %0, %1 : vector<8x32xf32>
    %5 = arith.mulf %4, %4 : vector<8x32xf32>
    %cst = arith.constant dense<0.000000e+00> : vector<8xf32>
    %6 = vector.multi_reduction <add>, %5, %cst [1] : vector<8x32xf32> to vector<8xf32>
    %7 = vector.shape_cast %6 : vector<8xf32> to vector<8x1xf32>
    %cst_4 = arith.constant 9.99999993E-9 : f32
    %8 = vector.broadcast %cst_4 : f32 to vector<8x1xf32>
    %9 = arith.addf %7, %8 : vector<8x1xf32>
    %10 = math.sqrt %9 : vector<8x1xf32>
    %11 = arith.subf %0, %2 : vector<8x32xf32>
    %12 = arith.mulf %11, %11 : vector<8x32xf32>
    %cst_5 = arith.constant dense<0.000000e+00> : vector<8xf32>
    %13 = vector.multi_reduction <add>, %12, %cst_5 [1] : vector<8x32xf32> to vector<8xf32>
    %14 = vector.shape_cast %13 : vector<8xf32> to vector<8x1xf32>
    %cst_6 = arith.constant 9.99999993E-9 : f32
    %15 = vector.broadcast %cst_6 : f32 to vector<8x1xf32>
    %16 = arith.addf %14, %15 : vector<8x1xf32>
    %17 = math.sqrt %16 : vector<8x1xf32>
    %18 = arith.subf %10, %3 : vector<8x1xf32>
    %cst_7 = arith.constant 2.000000e-01 : f32
    %19 = vector.broadcast %cst_7 : f32 to vector<8x1xf32>
    %20 = arith.addf %18, %19 : vector<8x1xf32>
    %cst_8 = arith.constant 0.000000e+00 : f32
    %21 = vector.broadcast %cst_8 : f32 to vector<8x1xf32>
    %22 = arith.maximumf %20, %21 : vector<8x1xf32>
    %23 = arith.subf %3, %17 : vector<8x1xf32>
    %cst_9 = arith.constant 2.000000e-01 : f32
    %24 = vector.broadcast %cst_9 : f32 to vector<8x1xf32>
    %25 = arith.addf %23, %24 : vector<8x1xf32>
    %cst_10 = arith.constant 0.000000e+00 : f32
    %26 = vector.broadcast %cst_10 : f32 to vector<8x1xf32>
    %27 = arith.maximumf %25, %26 : vector<8x1xf32>
    %cst_11 = arith.constant 0.000000e+00 : f32
    %28 = vector.broadcast %cst_11 : f32 to vector<8x1xf32>
    %29 = arith.cmpf ogt, %22, %28 : vector<8x1xf32>
    %cst_12 = arith.constant 0.000000e+00 : f32
    %30 = vector.broadcast %cst_12 : f32 to vector<8x1xf32>
    %31 = arith.cmpf ogt, %27, %30 : vector<8x1xf32>
    %32 = arith.ori %29, %31 : vector<8x1xi1>
    %33 = arith.extui %32 : vector<8x1xi1> to vector<8x1xi32>
    %34 = arith.sitofp %33 : vector<8x1xi32> to vector<8x1xf32>
    %35 = vector.shape_cast %34 : vector<8x1xf32> to vector<1x8x1xf32>
    %cst_13 = arith.constant dense<0.000000e+00> : vector<1xf32>
    %36 = vector.multi_reduction <add>, %35, %cst_13 [1, 2] : vector<1x8x1xf32> to vector<1xf32>
    %37 = vector.shape_cast %36 : vector<1xf32> to vector<1x1x1xf32>
    %38 = vector.extract %37[0, 0, 0] : f32 from vector<1x1x1xf32>
    %39 = arith.addf %22, %27 : vector<8x1xf32>
    %40 = vector.shape_cast %39 : vector<8x1xf32> to vector<1x8x1xf32>
    %cst_14 = arith.constant dense<0.000000e+00> : vector<1xf32>
    %41 = vector.multi_reduction <add>, %40, %cst_14 [1, 2] : vector<1x8x1xf32> to vector<1xf32>
    %42 = vector.shape_cast %41 : vector<1xf32> to vector<1x1x1xf32>
    %43 = vector.extract %42[0, 0, 0] : f32 from vector<1x1x1xf32>
    %cst_15 = arith.constant 1.000000e+00 : f32
    %44 = arith.maximumf %38, %cst_15 : f32
    %45 = arith.divf %43, %44 : f32
    %c0_16 = arith.constant 0 : index
    %c0_17 = arith.constant 0 : index
    %46 = memref.load %arg1[%c0_16, %c0_17] : memref<1x1xf32, #tpu.memory_space<smem>>
    memref.store %45, %arg1[%c0_16, %c0_17] : memref<1x1xf32, #tpu.memory_space<smem>>
    return
  }
}

</mosaic_0001>

<llo_original>
// kernel: margin_loss_pallas.1
$region0: #{margin_loss_pallas.1}
  #allocation0 [shape = 'u32[]', space=smem, size = 0x4, offset = 0x4, fixed_abs, tag = 'smem constant byte address 0x4 - core index']
  #allocation1 [shape = 'u32[144,128]{1,0:T(1,128)}', space=vmem, size = 0x12000, scoped, tag = 'internal scratch']
  %s0 = inlined_call_operand.vmem [shape: f32[8,128], index: 0, kind: input, shape index: {}]
  %s1 = inlined_call_operand.hbm [shape: f32[1,1], index: 1, kind: output, shape index: {}]
  %s2 = sld [smem:[#allocation0]]
  $region14: #{margin_loss_pallas.1} parent=0
    _
  %s4 = ssub.s32 1, %s2
  %s5 = scalar_select 0, %s4, %s2
  $region1: #{margin_loss_pallas.1} parent=0
    #allocation2 [shape = 'u8[512]{0}', space=smem, size = 0x200, scoped, tag = 'output window, operand 0, single buffered']
    #allocation3 [shape = 's32[1]{0}', space=sflag, size = 0x4, scoped, tag = 'scoped memory for margin_loss_pallas.1']
    %6 = vsyncpa [#allocation3], 0
    // Predicated region
    $region2: #{margin_loss_pallas.1} parent=1 // pred_check
      _
    $region3: #{margin_loss_pallas.1} parent=1 // pred_check_branch
      %8 = sbr.rel (0) target = $region5
    $region4: #{margin_loss_pallas.1} parent=1 // pred_region
      _
    $region5: #{margin_loss_pallas.1} parent=1 // pred_fallthru
      _
    %v9 = vld [vmem:[%s0] sm:$0xff]
    %11 = vrot.lane.b32.xlu0 %v9, 96
    %v12 = vpop.permute.xlu0 %11
    %v14 = vsub.f32 %v9, %v12
    %v15 = vmul.f32 %v14, %v14
    %vm16 = vcmask 261120
    %v17 = vsel %vm16, %v15, 0.0
    %18 = vadd.xlane.f32.xlu0 %v17
    %v19 = vpop.xlane.xlu0 %18
    %v20 = vadd.f32 %v19, 1e-08
    %v21 = vrsqrt.pop %v20
    %v22 = vmul.f32 %v20, %v21
    %vm23 = vcmp.eq.f32.partialorder %v20, inf
    %v24 = vsel %vm23, %v20, %v22
    %vm25 = vcmp.eq.f32.partialorder %v20, 0.0
    %v26 = vand.u32 %v20, 2147483648
    %v27 = vsel %vm25, %v26, %v24
    %28 = vrot.lane.b32.xlu0 %v9, 64
    %v29 = vpop.permute.xlu0 %28
    %v31 = vsub.f32 %v9, %v29
    %v32 = vmul.f32 %v31, %v31
    %v33 = vsel %vm16, %v32, 0.0
    %34 = vadd.xlane.f32.xlu0 %v33
    %v35 = vpop.xlane.xlu0 %34
    %v36 = vadd.f32 %v35, 1e-08
    %v37 = vrsqrt.pop %v36
    %v38 = vmul.f32 %v36, %v37
    %vm39 = vcmp.eq.f32.partialorder %v36, inf
    %v40 = vsel %vm39, %v36, %v38
    %vm41 = vcmp.eq.f32.partialorder %v36, 0.0
    %v42 = vand.u32 %v36, 2147483648
    %v43 = vsel %vm41, %v42, %v40
    %v44 = vsub.f32 %v27, %v9
    %v45 = vadd.f32 %v44, 0.2
    %v46 = vmax.f32 %v45, 0.0
    %v47 = vsub.f32 %v9, %v43
    %v48 = vadd.f32 %v47, 0.2
    %v49 = vmax.f32 %v48, 0.0
    %vm50 = vcmp.gt.f32.partialorder %v46, 0.0
    %vm51 = vcmp.gt.f32.partialorder %v49, 0.0
    %vm52 = vmor %vm50, %vm51
    %v53 = vsel %vm52, 1, 0
    %v54 = vcvt.s32.f32 %v53
    %56 = vrot.lane.b32.xlu0 %v54, 32
    %v57 = vpop.permute.xlu0 %56
    %vm59 = vcmask 7168
    %v60 = vsel %vm59, %v57, 0.0
    %61 = vadd.xlane.f32.xlu0 %v60
    %v62 = vpop.xlane.xlu0 %61
    %v63 = vrot.slane %v62, 4
    %v64 = vadd.f32 %v62, %v63
    %v65 = vrot.slane %v64, 2
    %v66 = vadd.f32 %v64, %v65
    %v67 = vrot.slane %v66, 1
    %v68 = vadd.f32 %v66, %v67
    %s69 = vtos %v68
    %v70 = vadd.f32 %v46, %v49
    %72 = vrot.lane.b32.xlu0 %v70, 32
    %v73 = vpop.permute.xlu0 %72
    %v75 = vsel %vm59, %v73, 0.0
    %76 = vadd.xlane.f32.xlu0 %v75
    %v77 = vpop.xlane.xlu0 %76
    %v78 = vrot.slane %v77, 4
    %v79 = vadd.f32 %v77, %v78
    %v80 = vrot.slane %v79, 2
    %v81 = vadd.f32 %v79, %v80
    %v82 = vrot.slane %v81, 1
    %v83 = vadd.f32 %v81, %v82
    %s84 = vtos %v83
    %s85 = smax.f32 %s69, 1.0
    %v86 = vstv %s85
    %v87 = vrcp.pop %v86
    %s88 = vtos %v87
    %s89 = smul.f32 %s84, %s88
    %s90 = scalar_lea.smem [#allocation2], 0
    %91 = sst [smem:[%s90]] %s89
    // Predicated region
    $region6: #{margin_loss_pallas.1} parent=1 // pred_check
      _
    $region7: #{margin_loss_pallas.1} parent=1 // pred_check_branch
      %93 = sbr.rel (0) target = $region9
    $region8: #{margin_loss_pallas.1} parent=1 // pred_region
      %s95 = ssub.s32 16, 16
      %96 = vsyncadd [#allocation3], %s95
      %99 = dma.smem_to_hbm [#allocation2], 16, %s1, [#allocation3]
    $region9: #{margin_loss_pallas.1} parent=1 // pred_fallthru
      _
    // Predicated region
    $region10: #{margin_loss_pallas.1} parent=1 // pred_check
      _
    $region11: #{margin_loss_pallas.1} parent=1 // pred_check_branch
      %101 = sbr.rel (0) target = $region13
    $region12: #{margin_loss_pallas.1} parent=1 // pred_region
      %102 = dma.done [#allocation3], 16
    $region13: #{margin_loss_pallas.1} parent=1 // pred_fallthru
      _
    %103 = sfence
    %104 = vsyncpa [#allocation3], 1

</llo_original>
